<compile_context>
chip_gen: v7x
topology: tpu7x:2x2x1
jax: 0.10.0
libtpu: 0.0.40
codegen_flags: <defaults>
</compile_context>

<pallas_src>
import math
import functools

import jax
import jax.numpy as jnp
from jax import lax
from jax.experimental import pallas as pl
from jax.experimental.pallas import tpu as pltpu


def _round_up(x, m):
    return (x + m - 1) // m * m


def _divisor_tile(padded, max_tile):
    """Largest multiple-of-128 divisor of `padded` (a multiple of 128) <= max_tile."""
    units = padded // 128
    max_units = max(1, min(units, max(max_tile, 128) // 128))
    for t in range(max_units, 0, -1):
        if units % t == 0:
            return t * 128
    return 128


# --------------------------------------------------------------------------
# Kernels
# --------------------------------------------------------------------------

def _x_tile(x_ref, k):
    """Current (TB, TK) slab of x.

    Blocked x      : x_ref is already the (TB, TK) tile for this (b, k).
    Resident 3-D x : x_ref is (K_tiles, TB, TK); pick slab k (dynamic 1st-axis index).
    """
    if x_ref.ndim == 3:
        return x_ref[k]
    return x_ref[...]


def _noisy_train_factored_kernel(x_ref, wmu_ref, wsig_ref, eps_in_ref, eps_out_ref,
                                 bmu_ref, bsig_ref, beps_ref, o_ref, acc_ref,
                                 *, mxu_dtype):
    k = pl.program_id(2)

    @pl.when(k == 0)
    def _():
        acc_ref[...] = jnp.zeros_like(acc_ref)

    xk = _x_tile(x_ref, k).astype(jnp.float32)                       # (TB, TK)

    # y += x @ mu.T       (contract last dims -> no weight transpose before the MXU)
    acc_ref[...] += lax.dot_general(
        xk.astype(mxu_dtype), wmu_ref[...].astype(mxu_dtype),
        dimension_numbers=(((1,), (1,)), ((), ())),
        preferred_element_type=jnp.float32)                          # (TB, TN)

    # y += eps_out * ((x * eps_in) @ sigma.T)   -- rank-1 epsilon factorization.
    xe = (xk * eps_in_ref[...].astype(jnp.float32)).astype(mxu_dtype)
    acc_ref[...] += eps_out_ref[...].astype(jnp.float32) * lax.dot_general(
        xe, wsig_ref[...].astype(mxu_dtype),
        dimension_numbers=(((1,), (1,)), ((), ())),
        preferred_element_type=jnp.float32)

    @pl.when(k == pl.num_programs(2) - 1)
    def _():
        b = (bmu_ref[...].astype(jnp.float32)
             + bsig_ref[...].astype(jnp.float32) * beps_ref[...].astype(jnp.float32))
        o_ref[...] = (acc_ref[...] + b).astype(o_ref.dtype)


def _noisy_train_full_kernel(x_ref, wmu_ref, wsig_ref, weps_ref,
                             bmu_ref, bsig_ref, beps_ref, o_ref, acc_ref,
                             *, mxu_dtype):
    k = pl.program_id(2)

    @pl.when(k == 0)
    def _():
        acc_ref[...] = jnp.zeros_like(acc_ref)

    xk = _x_tile(x_ref, k)
    w = (wmu_ref[...].astype(jnp.float32)
         + wsig_ref[...].astype(jnp.float32) * weps_ref[...].astype(jnp.float32))
    acc_ref[...] += lax.dot_general(
        xk.astype(mxu_dtype), w.astype(mxu_dtype),
        dimension_numbers=(((1,), (1,)), ((), ())),
        preferred_element_type=jnp.float32)

    @pl.when(k == pl.num_programs(2) - 1)
    def _():
        b = (bmu_ref[...].astype(jnp.float32)
             + bsig_ref[...].astype(jnp.float32) * beps_ref[...].astype(jnp.float32))
        o_ref[...] = (acc_ref[...] + b).astype(o_ref.dtype)


def _noisy_eval_kernel(x_ref, wmu_ref, bmu_ref, o_ref, acc_ref, *, mxu_dtype):
    k = pl.program_id(2)

    @pl.when(k == 0)
    def _():
        acc_ref[...] = jnp.zeros_like(acc_ref)

    xk = _x_tile(x_ref, k)
    acc_ref[...] += lax.dot_general(
        xk.astype(mxu_dtype), wmu_ref[...].astype(mxu_dtype),
        dimension_numbers=(((1,), (1,)), ((), ())),
        preferred_element_type=jnp.float32)

    @pl.when(k == pl.num_programs(2) - 1)
    def _():
        o_ref[...] = (acc_ref[...] + bmu_ref[...].astype(jnp.float32)).astype(o_ref.dtype)


# --------------------------------------------------------------------------
# Wrapper
# --------------------------------------------------------------------------

def noisy_forward(x, weight_mu, weight_sigma, bias_mu, bias_sigma, bias_epsilon, *,
                  weight_epsilon=None, eps_in=None, eps_out=None,
                  training=True, compute_dtype=jnp.float32,
                  max_tile_n=1024, max_tile_k=512):
    """NoisyNet linear forward. x: (B, in_features) -> (B, out_features).

    training=True fast path: pass eps_in/eps_out (the factored noise vectors) and
    only weight_mu/weight_sigma are streamed from HBM.  Passing weight_epsilon
    (the module's full buffer) instead uses the 3-stream fallback kernel.
    compute_dtype=jnp.bfloat16 halves weight HBM bytes and uses the native bf16
    MXU path on v5e/v6e/v7x (f32 accumulation kept); default f32 = exact module math.
    """
    B, in_f = x.shape
    out_f, _ = weight_mu.shape

    # ---- tiling (tiles divide the 128-padded dims exactly: no padding inflation)
    N_pad = _round_up(out_f, 128)
    K_pad = _round_up(in_f, 128)
    TN = _divisor_tile(N_pad, max_tile_n)
    TK = _divisor_tile(K_pad, max_tile_k)
    if N_pad // TN < 2 and N_pad >= 256:          # keep >=2 parallel n-tiles (v7x 2 TCs)
        TN = _divisor_tile(N_pad, N_pad // 2)

    if B <= 512:
        TB = _round_up(B, 8)
        B_pad = TB
    else:
        TB = 512
        B_pad = _round_up(B, TB)

    factored = training and (eps_in is not None) and (eps_out is not None)
    if training and not factored and weight_epsilon is None:
        raise ValueError("training=True requires (eps_in, eps_out) or weight_epsilon")
    n_w_streams = 1 if not training else (2 if factored else 3)

    x_itemsize = jnp.dtype(x.dtype).itemsize
    w_itemsize = jnp.dtype(compute_dtype).itemsize
    out_itemsize = x_itemsize

    # x fully VMEM-resident (one DMA per batch tile) when it fits a small budget.
    x_resident = TB * K_pad * x_itemsize <= (4 << 20)

    # ---- VMEM budgeting (double buffers + accumulator); shrink tiles if needed.
    def vmem_est(tn, tk, resident):
        x_cols = K_pad if resident else tk
        b = 2 * TB * x_cols * x_itemsize               # x stream
        b += n_w_streams * 2 * tn * tk * w_itemsize    # weight streams
        b += 2 * TB * tn * out_itemsize                # output stream
        b += TB * tn * 4                               # f32 accumulator scratch
        b += 8 * 2 * max(tn, tk) * 4                   # bias / eps row vectors
        return b

    VMEM_BUDGET = 40 << 20                             # safe on v7x (64 MiB physical)
    while vmem_est(TN, TK, x_resident) > VMEM_BUDGET:
        if x_resident:
            x_resident = False
        elif TK > 128:
            TK = _divisor_tile(K_pad, TK // 2)
        elif TN > 128:
            TN = _divisor_tile(N_pad, TN // 2)
        else:
            break
    vmem_limit = int(min(max(vmem_est(TN, TK, x_resident) + (2 << 20), 16 << 20),
                         64 << 20))

    # ---- padding helpers (no-ops for already padded / already cast params)
    def pad2(a, rows, cols, dtype=None):
        dtype = a.dtype if dtype is None else dtype
        if a.dtype != dtype:
            a = a.astype(dtype)
        pr, pc = rows - a.shape[0], cols - a.shape[1]
        if pr or pc:
            a = jnp.pad(a, ((0, pr), (0, pc)))
        return a

    def pad_row(v, cols):
        return pad2(v.reshape(1, -1), 1, cols)

    xp = pad2(x, B_pad, K_pad)
    K_tiles = K_pad // TK
    grid = (B_pad // TB, N_pad // TN, K_tiles)

    if x_resident and K_tiles > 1:
        # Resident layout (K_tiles, B_pad, TK): one DMA per b-tile, dynamic
        # first-axis indexing in-kernel (no lane-dim dynamic slice needed).
        x_in = xp.reshape(B_pad, K_tiles, TK).swapaxes(0, 1)
        x_spec = pl.BlockSpec((K_tiles, TB, TK), lambda b, n, k: (0, b, 0))
    elif x_resident:
        x_in = xp
        x_spec = pl.BlockSpec((TB, TK), lambda b, n, k: (b, 0))
    else:
        x_in = xp
        x_spec = pl.BlockSpec((TB, TK), lambda b, n, k: (b, k))

    w_spec = pl.BlockSpec((TN, TK), lambda b, n, k: (n, k))
    rown_spec = pl.BlockSpec((1, TN), lambda b, n, k: (0, n))
    rowk_spec = pl.BlockSpec((1, TK), lambda b, n, k: (0, k))
    o_spec = pl.BlockSpec((TB, TN), lambda b, n, k: (b, n))

    if not training:
        kernel = functools.partial(_noisy_eval_kernel, mxu_dtype=compute_dtype)
        args = (x_in,
                pad2(weight_mu, N_pad, K_pad, compute_dtype),
                pad_row(bias_mu, N_pad))
        in_specs = [x_spec, w_spec, rown_spec]
        n_matmuls = 1
    elif factored:
        kernel = functools.partial(_noisy_train_factored_kernel, mxu_dtype=compute_dtype)
        args = (x_in,
                pad2(weight_mu, N_pad, K_pad, compute_dtype),
                pad2(weight_sigma, N_pad, K_pad, compute_dtype),
                pad_row(eps_in, K_pad),
                pad_row(eps_out, N_pad),
                pad_row(bias_mu, N_pad),
                pad_row(bias_sigma, N_pad),
                pad_row(bias_epsilon, N_pad))
        in_specs = [x_spec, w_spec, w_spec, rowk_spec, rown_spec,
                    rown_spec, rown_spec, rown_spec]
        n_matmuls = 2
    else:
        kernel = functools.partial(_noisy_train_full_kernel, mxu_dtype=compute_dtype)
        args = (x_in,
                pad2(weight_mu, N_pad, K_pad, compute_dtype),
                pad2(weight_sigma, N_pad, K_pad, compute_dtype),
                pad2(weight_epsilon, N_pad, K_pad, compute_dtype),
                pad_row(bias_mu, N_pad),
                pad_row(bias_sigma, N_pad),
                pad_row(bias_epsilon, N_pad))
        in_specs = [x_spec, w_spec, w_spec, w_spec, rown_spec, rown_spec, rown_spec]
        n_matmuls = 1

    x_reads = 1 if x_resident else (N_pad // TN)
    cost = pl.CostEstimate(
        flops=2 * n_matmuls * B_pad * N_pad * K_pad,
        transcendentals=0,
        bytes_accessed=int(n_w_streams * N_pad * K_pad * w_itemsize
                           + x_reads * B_pad * K_pad * x_itemsize
                           + B_pad * N_pad * out_itemsize
                           + 8 * max(N_pad, K_pad) * 4),
    )

    out_pad = pl.pallas_call(
        kernel,
        out_shape=jax.ShapeDtypeStruct((B_pad, N_pad), x.dtype),
        grid_spec=pltpu.PrefetchScalarGridSpec(
            num_scalar_prefetch=0,
            grid=grid,
            in_specs=in_specs,
            out_specs=o_spec,
            scratch_shapes=[pltpu.VMEM((TB, TN), jnp.float32)],
        ),
        compiler_params=pltpu.CompilerParams(
            dimension_semantics=("parallel", "parallel", "arbitrary"),
            vmem_limit_bytes=vmem_limit,
        ),
        cost_estimate=cost,
    )(*args)

    return out_pad[:B, :out_f]


# --------------------------------------------------------------------------
# Parameter init (mirrors Noisy.reset_parameters / reset_noise)
# --------------------------------------------------------------------------

def _scale_noise(key, size):
    x = jax.random.normal(key, (size,), dtype=jnp.float32)
    return jnp.sign(x) * jnp.sqrt(jnp.abs(x))


def init_noisy_params(key, in_features, out_features, std_init=0.5):
    k_wmu, k_bmu, k_ein, k_eout, k_beps = jax.random.split(key, 5)
    mu_range = 1.0 / math.sqrt(in_features)

    weight_mu = jax.random.uniform(
        k_wmu, (out_features, in_features), jnp.float32, -mu_range, mu_range)
    weight_sigma = jnp.full((out_features, in_features),
                            std_init / math.sqrt(in_features), jnp.float32)
    bias_mu = jax.random.uniform(
        k_bmu, (out_features,), jnp.float32, -mu_range, mu_range)
    bias_sigma = jnp.full((out_features,),
                          std_init / math.sqrt(out_features), jnp.float32)

    eps_in = _scale_noise(k_ein, in_features)
    eps_out = _scale_noise(k_eout, out_features)
    weight_epsilon = jnp.outer(eps_out, eps_in)       # = epsilon_out.ger(epsilon_in)
    # Module draws a fresh sample for bias_epsilon (NOT epsilon_out) -- matched here.
    bias_epsilon = _scale_noise(k_beps, out_features)

    return dict(weight_mu=weight_mu, weight_sigma=weight_sigma,
                weight_epsilon=weight_epsilon, eps_in=eps_in, eps_out=eps_out,
                bias_mu=bias_mu, bias_sigma=bias_sigma, bias_epsilon=bias_epsilon)


def _reference(x, p, training):
    if training:
        w = p["weight_mu"] + p["weight_sigma"] * p["weight_epsilon"]
        b = p["bias_mu"] + p["bias_sigma"] * p["bias_epsilon"]
    else:
        w = p["weight_mu"]
        b = p["bias_mu"]
    return x @ w.T + b


if __name__ == "__main__":
    key = jax.random.PRNGKey(0)
    k_x, k_p = jax.random.split(key)

    # --- small shapes consistent with the module --------------------------------
    B, in_features, out_features = 8, 32, 64
    x = jax.random.normal(k_x, (B, in_features), dtype=jnp.float32)
    p = init_noisy_params(k_p, in_features, out_features, std_init=0.5)

    # training, factored-noise fast path (2 weight streams)
    y = jax.block_until_ready(noisy_forward(
        x, p["weight_mu"], p["weight_sigma"], p["bias_mu"], p["bias_sigma"],
        p["bias_epsilon"], eps_in=p["eps_in"], eps_out=p["eps_out"], training=True))
    assert jnp.allclose(y, _reference(x, p, True), atol=1e-4, rtol=1e-4), \
        "train factored mismatch (small)"

    # training, full weight_epsilon fallback (module buffer interface)
    y_full = jax.block_until_ready(noisy_forward(
        x, p["weight_mu"], p["weight_sigma"], p["bias_mu"], p["bias_sigma"],
        p["bias_epsilon"], weight_epsilon=p["weight_epsilon"], training=True))
    assert jnp.allclose(y_full, _reference(x, p, True), atol=1e-4, rtol=1e-4), \
        "train full mismatch (small)"

    # eval (mu / bias_mu only)
    y_eval = jax.block_until_ready(noisy_forward(
        x, p["weight_mu"], p["weight_sigma"], p["bias_mu"], p["bias_sigma"],
        p["bias_epsilon"], training=False))
    assert jnp.allclose(y_eval, _reference(x, p, False), atol=1e-4, rtol=1e-4), \
        "eval mismatch (small)"

    # --- larger, non-aligned shapes: multi K-step (640 = 5x128) + multi n-tile --
    k_x2, k_p2 = jax.random.split(jax.random.PRNGKey(1))
    B2, in2, out2 = 16, 640, 384
    x2 = jax.random.normal(k_x2, (B2, in2), dtype=jnp.float32)
    p2 = init_noisy_params(k_p2, in2, out2, std_init=0.5)

    y2 = jax.block_until_ready(noisy_forward(
        x2, p2["weight_mu"], p2["weight_sigma"], p2["bias_mu"], p2["bias_sigma"],
        p2["bias_epsilon"], eps_in=p2["eps_in"], eps_out=p2["eps_out"], training=True))
    assert jnp.allclose(y2, _reference(x2, p2, True), atol=1e-4, rtol=1e-4), \
        "train factored mismatch (tiled)"

    y2f = jax.block_until_ready(noisy_forward(
        x2, p2["weight_mu"], p2["weight_sigma"], p2["bias_mu"], p2["bias_sigma"],
        p2["bias_epsilon"], weight_epsilon=p2["weight_epsilon"], training=True))
    assert jnp.allclose(y2f, _reference(x2, p2, True), atol=1e-4, rtol=1e-4), \
        "train full mismatch (tiled)"

    y2e = jax.block_until_ready(noisy_forward(
        x2, p2["weight_mu"], p2["weight_sigma"], p2["bias_mu"], p2["bias_sigma"],
        p2["bias_epsilon"], training=False))
    assert jnp.allclose(y2e, _reference(x2, p2, False), atol=1e-4, rtol=1e-4), \
        "eval mismatch (tiled)"

    # --- bf16 weight streaming (half the HBM bytes; looser tolerance) -----------
    y2b = jax.block_until_ready(noisy_forward(
        x2, p2["weight_mu"], p2["weight_sigma"], p2["bias_mu"], p2["bias_sigma"],
        p2["bias_epsilon"], eps_in=p2["eps_in"], eps_out=p2["eps_out"],
        training=True, compute_dtype=jnp.bfloat16))
    assert jnp.allclose(y2b, _reference(x2, p2, True), atol=3e-2, rtol=3e-2), \
        "train bf16 mismatch (tiled)"

    print("KERNEL_OK")
</pallas_src>

<mosaic_0001>
module attributes {stable_mosaic.version = 11 : i64} {
  func.func @_noisy_train_factored_kernel(%arg0: i32, %arg1: i32, %arg2: i32, %arg3: memref<8x128xf32, #tpu.memory_space<vmem>>, %arg4: memref<128x128xf32, #tpu.memory_space<vmem>>, %arg5: memref<128x128xf32, #tpu.memory_space<vmem>>, %arg6: memref<1x128xf32, #tpu.memory_space<vmem>>, %arg7: memref<1x128xf32, #tpu.memory_space<vmem>>, %arg8: memref<1x128xf32, #tpu.memory_space<vmem>>, %arg9: memref<1x128xf32, #tpu.memory_space<vmem>>, %arg10: memref<1x128xf32, #tpu.memory_space<vmem>>, %arg11: memref<8x128xf32, #tpu.memory_space<vmem>>, %arg12: memref<8x128xf32, #tpu.memory_space<vmem>>) attributes {dimension_semantics = [#tpu.dimension_semantics<parallel>, #tpu.dimension_semantics<parallel>, #tpu.dimension_semantics<arbitrary>], iteration_bounds = array<i64: 1, 1, 1>, scalar_prefetch = 0 : i64, scratch_operands = 1 : i64, tpu.core_type = #tpu.core_type<tc>, window_params = [{transform_indices = @transform_0, window_bounds = array<i64: 8, 128>}, {transform_indices = @transform_1, window_bounds = array<i64: 128, 128>}, {transform_indices = @transform_2, window_bounds = array<i64: 128, 128>}, {transform_indices = @transform_3, window_bounds = array<i64: 1, 128>}, {transform_indices = @transform_4, window_bounds = array<i64: 1, 128>}, {transform_indices = @transform_5, window_bounds = array<i64: 1, 128>}, {transform_indices = @transform_6, window_bounds = array<i64: 1, 128>}, {transform_indices = @transform_7, window_bounds = array<i64: 1, 128>}, {transform_indices = @transform_8, window_bounds = array<i64: 8, 128>}]} {
    %c0_i32 = arith.constant 0 : i32
    %0 = arith.cmpi eq, %arg2, %c0_i32 : i32
    %1 = arith.extui %0 : i1 to i32
    %c0_i32_0 = arith.constant 0 : i32
    %2 = arith.cmpi ne, %1, %c0_i32_0 : i32
    scf.if %2 {
      %cst_21 = arith.constant 0.000000e+00 : f32
      %23 = vector.broadcast %cst_21 : f32 to vector<8x128xf32>
      %c0_22 = arith.constant 0 : index
      %c0_23 = arith.constant 0 : index
      %24 = vector.load %arg12[%c0_22, %c0_23] : memref<8x128xf32, #tpu.memory_space<vmem>>, vector<8x128xf32>
      tpu.vector_store %arg12[%c0_22, %c0_23], %23 {strides = array<i32>} : memref<8x128xf32, #tpu.memory_space<vmem>>, vector<8x128xf32>,
    } else {
    }
    %c0 = arith.constant 0 : index
    %c0_1 = arith.constant 0 : index
    %3 = vector.load %arg3[%c0, %c0_1] : memref<8x128xf32, #tpu.memory_space<vmem>>, vector<8x128xf32>
    %c0_2 = arith.constant 0 : index
    %c0_3 = arith.constant 0 : index
    %4 = vector.load %arg12[%c0_2, %c0_3] : memref<8x128xf32, #tpu.memory_space<vmem>>, vector<8x128xf32>
    %c0_4 = arith.constant 0 : index
    %c0_5 = arith.constant 0 : index
    %5 = vector.load %arg4[%c0_4, %c0_5] : memref<128x128xf32, #tpu.memory_space<vmem>>, vector<128x128xf32>
    %cst = arith.constant dense<0.000000e+00> : vector<8x128xf32>
    %6 = tpu.matmul %3, %5, %cst {dimension_numbers = #tpu.dot_dimension_numbers<[1], [1], [0], [0], [0, 0, 1, 0], [], []>} : vector<8x128xf32>, vector<128x128xf32>, vector<8x128xf32> -> vector<8x128xf32>
    %7 = arith.addf %4, %6 : vector<8x128xf32>
    %c0_6 = arith.constant 0 : index
    %c0_7 = arith.constant 0 : index
    %8 = vector.load %arg12[%c0_6, %c0_7] : memref<8x128xf32, #tpu.memory_space<vmem>>, vector<8x128xf32>
    tpu.vector_store %arg12[%c0_6, %c0_7], %7 {strides = array<i32>} : memref<8x128xf32, #tpu.memory_space<vmem>>, vector<8x128xf32>,
    %c0_8 = arith.constant 0 : index
    %c0_9 = arith.constant 0 : index
    %9 = vector.load %arg6[%c0_8, %c0_9] : memref<1x128xf32, #tpu.memory_space<vmem>>, vector<1x128xf32>
    %10 = vector.broadcast %9 : vector<1x128xf32> to vector<8x128xf32>
    %11 = arith.mulf %3, %10 : vector<8x128xf32>
    %c0_10 = arith.constant 0 : index
    %c0_11 = arith.constant 0 : index
    %12 = vector.load %arg12[%c0_10, %c0_11] : memref<8x128xf32, #tpu.memory_space<vmem>>, vector<8x128xf32>
    %c0_12 = arith.constant 0 : index
    %c0_13 = arith.constant 0 : index
    %13 = vector.load %arg7[%c0_12, %c0_13] : memref<1x128xf32, #tpu.memory_space<vmem>>, vector<1x128xf32>
    %c0_14 = arith.constant 0 : index
    %c0_15 = arith.constant 0 : index
    %14 = vector.load %arg5[%c0_14, %c0_15] : memref<128x128xf32, #tpu.memory_space<vmem>>, vector<128x128xf32>
    %cst_16 = arith.constant dense<0.000000e+00> : vector<8x128xf32>
    %15 = tpu.matmul %11, %14, %cst_16 {dimension_numbers = #tpu.dot_dimension_numbers<[1], [1], [0], [0], [0, 0, 1, 0], [], []>} : vector<8x128xf32>, vector<128x128xf32>, vector<8x128xf32> -> vector<8x128xf32>
    %16 = vector.broadcast %13 : vector<1x128xf32> to vector<8x128xf32>
    %17 = arith.mulf %16, %15 : vector<8x128xf32>
    %18 = arith.addf %12, %17 : vector<8x128xf32>
    %c0_17 = arith.constant 0 : index
    %c0_18 = arith.constant 0 : index
    %19 = vector.load %arg12[%c0_17, %c0_18] : memref<8x128xf32, #tpu.memory_space<vmem>>, vector<8x128xf32>
    tpu.vector_store %arg12[%c0_17, %c0_18], %18 {strides = array<i32>} : memref<8x128xf32, #tpu.memory_space<vmem>>, vector<8x128xf32>,
    %c0_i32_19 = arith.constant 0 : i32
    %20 = arith.cmpi eq, %arg2, %c0_i32_19 : i32
    %21 = arith.extui %20 : i1 to i32
    %c0_i32_20 = arith.constant 0 : i32
    %22 = arith.cmpi ne, %21, %c0_i32_20 : i32
    scf.if %22 {
      %c0_21 = arith.constant 0 : index
      %c0_22 = arith.constant 0 : index
      %23 = vector.load %arg8[%c0_21, %c0_22] : memref<1x128xf32, #tpu.memory_space<vmem>>, vector<1x128xf32>
      %c0_23 = arith.constant 0 : index
      %c0_24 = arith.constant 0 : index
      %24 = vector.load %arg9[%c0_23, %c0_24] : memref<1x128xf32, #tpu.memory_space<vmem>>, vector<1x128xf32>
      %c0_25 = arith.constant 0 : index
      %c0_26 = arith.constant 0 : index
      %25 = vector.load %arg10[%c0_25, %c0_26] : memref<1x128xf32, #tpu.memory_space<vmem>>, vector<1x128xf32>
      %26 = arith.mulf %24, %25 : vector<1x128xf32>
      %27 = arith.addf %23, %26 : vector<1x128xf32>
      %c0_27 = arith.constant 0 : index
      %c0_28 = arith.constant 0 : index
      %28 = vector.load %arg12[%c0_27, %c0_28] : memref<8x128xf32, #tpu.memory_space<vmem>>, vector<8x128xf32>
      %29 = vector.broadcast %27 : vector<1x128xf32> to vector<8x128xf32>
      %30 = arith.addf %28, %29 : vector<8x128xf32>
      %c0_29 = arith.constant 0 : index
      %c0_30 = arith.constant 0 : index
      %31 = vector.load %arg11[%c0_29, %c0_30] : memref<8x128xf32, #tpu.memory_space<vmem>>, vector<8x128xf32>
      tpu.vector_store %arg11[%c0_29, %c0_30], %30 {strides = array<i32>} : memref<8x128xf32, #tpu.memory_space<vmem>>, vector<8x128xf32>,
    } else {
    }
    return
  }
  func.func @transform_0(%arg0: i32, %arg1: i32, %arg2: i32) -> (i32, i32) {
    %c0_i32 = arith.constant 0 : i32
    %c0_i32_0 = arith.constant 0 : i32
    return %arg0, %c0_i32 : i32, i32
  }
  func.func @transform_1(%arg0: i32, %arg1: i32, %arg2: i32) -> (i32, i32) {
    %c0_i32 = arith.constant 0 : i32
    return %arg1, %arg2 : i32, i32
  }
  func.func @transform_2(%arg0: i32, %arg1: i32, %arg2: i32) -> (i32, i32) {
    %c0_i32 = arith.constant 0 : i32
    return %arg1, %arg2 : i32, i32
  }
  func.func @transform_3(%arg0: i32, %arg1: i32, %arg2: i32) -> (i32, i32) {
    %c0_i32 = arith.constant 0 : i32
    %c0_i32_0 = arith.constant 0 : i32
    return %c0_i32, %arg2 : i32, i32
  }
  func.func @transform_4(%arg0: i32, %arg1: i32, %arg2: i32) -> (i32, i32) {
    %c0_i32 = arith.constant 0 : i32
    %c0_i32_0 = arith.constant 0 : i32
    return %c0_i32, %arg1 : i32, i32
  }
  func.func @transform_5(%arg0: i32, %arg1: i32, %arg2: i32) -> (i32, i32) {
    %c0_i32 = arith.constant 0 : i32
    %c0_i32_0 = arith.constant 0 : i32
    return %c0_i32, %arg1 : i32, i32
  }
  func.func @transform_6(%arg0: i32, %arg1: i32, %arg2: i32) -> (i32, i32) {
    %c0_i32 = arith.constant 0 : i32
    %c0_i32_0 = arith.constant 0 : i32
    return %c0_i32, %arg1 : i32, i32
  }
  func.func @transform_7(%arg0: i32, %arg1: i32, %arg2: i32) -> (i32, i32) {
    %c0_i32 = arith.constant 0 : i32
    %c0_i32_0 = arith.constant 0 : i32
    return %c0_i32, %arg1 : i32, i32
  }
  func.func @transform_8(%arg0: i32, %arg1: i32, %arg2: i32) -> (i32, i32) {
    %c0_i32 = arith.constant 0 : i32
    return %arg0, %arg1 : i32, i32
  }
}

</mosaic_0001>

<llo_original>
// kernel: tpu_custom_call.1
$region0: #{tpu_custom_call.1}
  #allocation0 [shape = 'u32[]', space=smem, size = 0x4, offset = 0x4, fixed_abs, tag = 'smem constant byte address 0x4 - core index']
  #allocation1 [shape = 'u32[144,128]{1,0:T(1,128)}', space=vmem, size = 0x12000, scoped, tag = 'internal scratch']
  #allocation2 [shape = 'f32[8,128]{1,0:T(8,128)}', space=vmem, size = 0x1000, scoped, tag = 'scratch operand']
  %s0 = inlined_call_operand.hbm [shape: f32[8,128], index: 0, kind: input, shape index: {}]
  %s1 = inlined_call_operand.hbm [shape: f32[128,128], index: 1, kind: input, shape index: {}]
  %s2 = inlined_call_operand.hbm [shape: f32[128,128], index: 2, kind: input, shape index: {}]
  %s3 = inlined_call_operand.vmem [shape: f32[1,128], index: 3, kind: input, shape index: {}]
  %s4 = inlined_call_operand.vmem [shape: f32[1,128], index: 4, kind: input, shape index: {}]
  %s5 = inlined_call_operand.vmem [shape: f32[1,128], index: 5, kind: input, shape index: {}]
  %s6 = inlined_call_operand.vmem [shape: f32[1,128], index: 6, kind: input, shape index: {}]
  %s7 = inlined_call_operand.vmem [shape: f32[1,128], index: 7, kind: input, shape index: {}]
  %s8 = inlined_call_operand.hbm [shape: f32[8,128], index: 8, kind: output, shape index: {}]
  %s9 = sld [smem:[#allocation0]]
  $region62: #{tpu_custom_call.1} parent=0
    _
  %s11 = ssub.s32 1, %s9
  %s12 = scalar_select 0, %s11, %s9
  $region1: #{tpu_custom_call.1} parent=0
    #allocation3 [shape = 'u8[4096]{0}', space=vmem, size = 0x1000, scoped, tag = 'input window, operand 0, single buffered']
    #allocation4 [shape = 's32[1]{0}', space=sflag, size = 0x4, scoped, tag = 'scoped memory for tpu_custom_call.1']
    #allocation5 [shape = 's32[1]{0}', space=sflag, size = 0x4, scoped, tag = 'scoped memory for tpu_custom_call.1']
    #allocation6 [shape = 'u8[65536]{0}', space=vmem, size = 0x10000, scoped, tag = 'input window, operand 1, single buffered']
    #allocation7 [shape = 's32[1]{0}', space=sflag, size = 0x4, scoped, tag = 'scoped memory for tpu_custom_call.1']
    #allocation8 [shape = 'u8[65536]{0}', space=vmem, size = 0x10000, scoped, tag = 'input window, operand 2, single buffered']
    #allocation9 [shape = 'u8[4096]{0}', space=vmem, size = 0x1000, scoped, tag = 'output window, operand 0, single buffered']
    %13 = vsyncpa [#allocation4], 0
    %14 = vsyncpa [#allocation7], 0
    %15 = vsyncpa [#allocation5], 0
    // Predicated region
    $region2: #{tpu_custom_call.1} parent=1 // pred_check
      _
    $region3: #{tpu_custom_call.1} parent=1 // pred_check_branch
      %17 = sbr.rel (0) target = $region5
    $region4: #{tpu_custom_call.1} parent=1 // pred_region
      %s19 = ssub.s32 128, 128
      %20 = vsyncadd [#allocation4], %s19
      %s22 = sshll.u32 [#allocation3], 4
      %s23 = int_to_ptr.vmem [resolvable:$true] %s22
      %25 = dma.hbm_to_vmem [thread:$0]  %s0, 128, %s23, [#allocation4]
    $region5: #{tpu_custom_call.1} parent=1 // pred_fallthru
      _
    // Predicated region
    $region6: #{tpu_custom_call.1} parent=1 // pred_check
      _
    $region7: #{tpu_custom_call.1} parent=1 // pred_check_branch
      %27 = sbr.rel (0) target = $region9
    $region8: #{tpu_custom_call.1} parent=1 // pred_region
      %s29 = ssub.s32 2048, 2048
      %30 = vsyncadd [#allocation7], %s29
      %s31 = sshll.u32 [#allocation6], 4
      %s32 = int_to_ptr.vmem [resolvable:$true] %s31
      %37 = dma.hbm_to_vmem [thread:$0]  %s1, 2048, %s32, [#allocation7], 128, 128, 8
    $region9: #{tpu_custom_call.1} parent=1 // pred_fallthru
      _
    // Predicated region
    $region10: #{tpu_custom_call.1} parent=1 // pred_check
      _
    $region11: #{tpu_custom_call.1} parent=1 // pred_check_branch
      %39 = sbr.rel (0) target = $region13
    $region12: #{tpu_custom_call.1} parent=1 // pred_region
      %s41 = ssub.s32 2048, 2048
      %42 = vsyncadd [#allocation7], %s41
      %s43 = sshll.u32 [#allocation8], 4
      %s44 = int_to_ptr.vmem [resolvable:$true] %s43
      %49 = dma.hbm_to_vmem [thread:$0]  %s2, 2048, %s44, [#allocation7], 128, 128, 8
    $region13: #{tpu_custom_call.1} parent=1 // pred_fallthru
      _
    // Predicated region
    $region14: #{tpu_custom_call.1} parent=1 // pred_check
      _
    $region15: #{tpu_custom_call.1} parent=1 // pred_check_branch
      %51 = sbr.rel (0) target = $region17
    $region16: #{tpu_custom_call.1} parent=1 // pred_region
      _
    $region17: #{tpu_custom_call.1} parent=1 // pred_fallthru
      _
    // Predicated region
    $region18: #{tpu_custom_call.1} parent=1 // pred_check
      _
    $region19: #{tpu_custom_call.1} parent=1 // pred_check_branch
      %53 = sbr.rel (0) target = $region21
    $region20: #{tpu_custom_call.1} parent=1 // pred_region
      _
    $region21: #{tpu_custom_call.1} parent=1 // pred_fallthru
      _
    // Predicated region
    $region22: #{tpu_custom_call.1} parent=1 // pred_check
      _
    $region23: #{tpu_custom_call.1} parent=1 // pred_check_branch
      %55 = sbr.rel (0) target = $region25
    $region24: #{tpu_custom_call.1} parent=1 // pred_region
      _
    $region25: #{tpu_custom_call.1} parent=1 // pred_fallthru
      _
    // Predicated region
    $region26: #{tpu_custom_call.1} parent=1 // pred_check
      _
    $region27: #{tpu_custom_call.1} parent=1 // pred_check_branch
      %57 = sbr.rel (0) target = $region29
    $region28: #{tpu_custom_call.1} parent=1 // pred_region
      _
    $region29: #{tpu_custom_call.1} parent=1 // pred_fallthru
      _
    // Predicated region
    $region30: #{tpu_custom_call.1} parent=1 // pred_check
      _
    $region31: #{tpu_custom_call.1} parent=1 // pred_check_branch
      %59 = sbr.rel (0) target = $region33
    $region32: #{tpu_custom_call.1} parent=1 // pred_region
      _
    $region33: #{tpu_custom_call.1} parent=1 // pred_fallthru
      _
    // Predicated region
    $region34: #{tpu_custom_call.1} parent=1 // pred_check
      _
    $region35: #{tpu_custom_call.1} parent=1 // pred_check_branch
      %61 = sbr.rel (0) target = $region37
    $region36: #{tpu_custom_call.1} parent=1 // pred_region
      %62 = dma.done [#allocation4], 128
    $region37: #{tpu_custom_call.1} parent=1 // pred_fallthru
      _
    // Predicated region
    $region38: #{tpu_custom_call.1} parent=1 // pred_check
      _
    $region39: #{tpu_custom_call.1} parent=1 // pred_check_branch
      %64 = sbr.rel (0) target = $region41
    $region40: #{tpu_custom_call.1} parent=1 // pred_region
      %65 = dma.done [#allocation7], 2048
    $region41: #{tpu_custom_call.1} parent=1 // pred_fallthru
      _
    // Predicated region
    $region42: #{tpu_custom_call.1} parent=1 // pred_check
      _
    $region43: #{tpu_custom_call.1} parent=1 // pred_check_branch
      %67 = sbr.rel (0) target = $region45
    $region44: #{tpu_custom_call.1} parent=1 // pred_region
      %68 = dma.done [#allocation7], 2048
    $region45: #{tpu_custom_call.1} parent=1 // pred_fallthru
      _
    %p69 = scmp.eq.s32.totalorder 0, 0
    // Predicated region
    $region46: #{tpu_custom_call.1} parent=1 // pred_check
      %p70 = pneg %p69
    $region47: #{tpu_custom_call.1} parent=1 // pred_check_branch
      %72 = sbr.rel (%p70) target = $region49
    $region48: #{tpu_custom_call.1} parent=1 // pred_region
      %73 = vst [vmem:[#allocation2] sm:$0xff] 0.0
    $region49: #{tpu_custom_call.1} parent=1 // pred_fallthru
      _
    %v74 = vld [vmem:[#allocation3] sm:$0xff]
    %v75 = vld [vmem:[#allocation2] sm:$0xff]
    %v76 = vld [vmem:[#allocation6] sm:$0xff]
    %v77 = vld [vmem:[#allocation6 + $0x8] sm:$0xff]
    %v78 = vld [vmem:[#allocation6 + $0x10] sm:$0xff]
    %v79 = vld [vmem:[#allocation6 + $0x18] sm:$0xff]
    %v80 = vld [vmem:[#allocation6 + $0x20] sm:$0xff]
    %v81 = vld [vmem:[#allocation6 + $0x28] sm:$0xff]
    %v82 = vld [vmem:[#allocation6 + $0x30] sm:$0xff]
    %v83 = vld [vmem:[#allocation6 + $0x38] sm:$0xff]
    %v84 = vld [vmem:[#allocation6 + $0x40] sm:$0xff]
    %v85 = vld [vmem:[#allocation6 + $0x48] sm:$0xff]
    %v86 = vld [vmem:[#allocation6 + $0x50] sm:$0xff]
    %v87 = vld [vmem:[#allocation6 + $0x58] sm:$0xff]
    %v88 = vld [vmem:[#allocation6 + $0x60] sm:$0xff]
    %v89 = vld [vmem:[#allocation6 + $0x68] sm:$0xff]
    %v90 = vld [vmem:[#allocation6 + $0x70] sm:$0xff]
    %v91 = vld [vmem:[#allocation6 + $0x78] sm:$0xff]
    %92 = vmatprep.subr.mxu0 0.0
    %93 = vmatpush1.xpose.msra.mxu0 %v76
    %94 = vmatprep.subr.mxu0 0.0
    %95 = vmatpush1.xpose.msra.mxu0 %v77
    %96 = vmatprep.subr.mxu0 0.0
    %97 = vmatpush1.xpose.msra.mxu0 %v78
    %98 = vmatprep.subr.mxu0 0.0
    %99 = vmatpush1.xpose.msra.mxu0 %v79
    %100 = vmatprep.subr.mxu0 0.0
    %101 = vmatpush1.xpose.msra.mxu0 %v80
    %102 = vmatprep.subr.mxu0 0.0
    %103 = vmatpush1.xpose.msra.mxu0 %v81
    %104 = vmatprep.subr.mxu0 0.0
    %105 = vmatpush1.xpose.msra.mxu0 %v82
    %106 = vmatprep.subr.mxu0 0.0
    %107 = vmatpush1.xpose.msra.mxu0 %v83
    %108 = vmatprep.subr.mxu0 0.0
    %109 = vmatpush1.xpose.msra.mxu0 %v84
    %110 = vmatprep.subr.mxu0 0.0
    %111 = vmatpush1.xpose.msra.mxu0 %v85
    %112 = vmatprep.subr.mxu0 0.0
    %113 = vmatpush1.xpose.msra.mxu0 %v86
    %114 = vmatprep.subr.mxu0 0.0
    %115 = vmatpush1.xpose.msra.mxu0 %v87
    %116 = vmatprep.subr.mxu0 0.0
    %117 = vmatpush1.xpose.msra.mxu0 %v88
    %118 = vmatprep.subr.mxu0 0.0
    %119 = vmatpush1.xpose.msra.mxu0 %v89
    %120 = vmatprep.subr.mxu0 0.0
    %121 = vmatpush1.xpose.msra.mxu0 %v90
    %122 = vmatprep.subr.mxu0 0.0
    %123 = vmatpush1.xpose.msra.mxu0 %v91
    %124 = vmatprep.subr.mxu0 0.0
    %125 = vmatpush1.xpose.msra.mxu0 0.0
    %126 = vmatprep.subr.mxu0 0.0
    %127 = vmatpush1.xpose.msra.mxu0 0.0
    %128 = vmatprep.subr.mxu0 0.0
    %129 = vmatpush1.xpose.msra.mxu0 0.0
    %130 = vmatprep.subr.mxu0 0.0
    %131 = vmatpush1.xpose.msra.mxu0 0.0
    %132 = vmatprep.subr.mxu0 0.0
    %133 = vmatpush1.xpose.msra.mxu0 0.0
    %134 = vmatprep.subr.mxu0 0.0
    %135 = vmatpush1.xpose.msra.mxu0 0.0
    %136 = vmatprep.subr.mxu0 0.0
    %137 = vmatpush1.xpose.msra.mxu0 0.0
    %138 = vmatprep.subr.mxu0 0.0
    %139 = vmatpush1.xpose.msra.mxu0 0.0
    %140 = vmatprep.subr.mxu0 0.0
    %141 = vmatpush1.xpose.msra.mxu0 0.0
    %142 = vmatprep.subr.mxu0 0.0
    %143 = vmatpush1.xpose.msra.mxu0 0.0
    %144 = vmatprep.subr.mxu0 0.0
    %145 = vmatpush1.xpose.msra.mxu0 0.0
    %146 = vmatprep.subr.mxu0 0.0
    %147 = vmatpush1.xpose.msra.mxu0 0.0
    %148 = vmatprep.subr.mxu0 0.0
    %149 = vmatpush1.xpose.msra.mxu0 0.0
    %150 = vmatprep.subr.mxu0 0.0
    %151 = vmatpush1.xpose.msra.mxu0 0.0
    %152 = vmatprep.subr.mxu0 0.0
    %153 = vmatpush1.xpose.msra.mxu0 0.0
    %154 = vmatprep.subr.mxu0 0.0
    %155 = vmatpush1.xpose.msra.mxu0 0.0
    %156 = vmatprep.mubr.f32.mxu0 0.0
    %157 = vmatmul.mubr.f32.gmra.mrb[0].mxu0 %v74
    %v158 = vpop.f32.mrb[0].mxu0
    %v159 = vadd.f32 0.0, %v158
    %v160 = vpop.f32.mrb[0].mxu0
    %161 = vdwg.mxu0
    %v162 = vadd.f32 %v75, %v159
    %163 = vst [vmem:[#allocation2] sm:$0xff] %v162
    %v164 = vld [vmem:[%s3] sm:$0x1]
    %v166 = vlaneseq
    %v167 = vshrl.u32 %v166, 7
    %v168 = vsub.s32 0, %v167
    %v169 = vrot.slane %v164, %v168
    %v171 = vmul.f32 %v74, %v169
    %v172 = vld [vmem:[#allocation2] sm:$0xff]
    %v173 = vld [vmem:[%s4] sm:$0x1]
    %v174 = vld [vmem:[#allocation8] sm:$0xff]
    %v175 = vld [vmem:[#allocation8 + $0x8] sm:$0xff]
    %v176 = vld [vmem:[#allocation8 + $0x10] sm:$0xff]
    %v177 = vld [vmem:[#allocation8 + $0x18] sm:$0xff]
    %v178 = vld [vmem:[#allocation8 + $0x20] sm:$0xff]
    %v179 = vld [vmem:[#allocation8 + $0x28] sm:$0xff]
    %v180 = vld [vmem:[#allocation8 + $0x30] sm:$0xff]
    %v181 = vld [vmem:[#allocation8 + $0x38] sm:$0xff]
    %v182 = vld [vmem:[#allocation8 + $0x40] sm:$0xff]
    %v183 = vld [vmem:[#allocation8 + $0x48] sm:$0xff]
    %v184 = vld [vmem:[#allocation8 + $0x50] sm:$0xff]
    %v185 = vld [vmem:[#allocation8 + $0x58] sm:$0xff]
    %v186 = vld [vmem:[#allocation8 + $0x60] sm:$0xff]
    %v187 = vld [vmem:[#allocation8 + $0x68] sm:$0xff]
    %v188 = vld [vmem:[#allocation8 + $0x70] sm:$0xff]
    %v189 = vld [vmem:[#allocation8 + $0x78] sm:$0xff]
    %190 = vmatprep.subr.mxu0 0.0
    %191 = vmatpush1.xpose.msra.mxu0 %v174
    %192 = vmatprep.subr.mxu0 0.0
    %193 = vmatpush1.xpose.msra.mxu0 %v175
    %194 = vmatprep.subr.mxu0 0.0
    %195 = vmatpush1.xpose.msra.mxu0 %v176
    %196 = vmatprep.subr.mxu0 0.0
    %197 = vmatpush1.xpose.msra.mxu0 %v177
    %198 = vmatprep.subr.mxu0 0.0
    %199 = vmatpush1.xpose.msra.mxu0 %v178
    %200 = vmatprep.subr.mxu0 0.0
    %201 = vmatpush1.xpose.msra.mxu0 %v179
    %202 = vmatprep.subr.mxu0 0.0
    %203 = vmatpush1.xpose.msra.mxu0 %v180
    %204 = vmatprep.subr.mxu0 0.0
    %205 = vmatpush1.xpose.msra.mxu0 %v181
    %206 = vmatprep.subr.mxu0 0.0
    %207 = vmatpush1.xpose.msra.mxu0 %v182
    %208 = vmatprep.subr.mxu0 0.0
    %209 = vmatpush1.xpose.msra.mxu0 %v183
    %210 = vmatprep.subr.mxu0 0.0
    %211 = vmatpush1.xpose.msra.mxu0 %v184
    %212 = vmatprep.subr.mxu0 0.0
    %213 = vmatpush1.xpose.msra.mxu0 %v185
    %214 = vmatprep.subr.mxu0 0.0
    %215 = vmatpush1.xpose.msra.mxu0 %v186
    %216 = vmatprep.subr.mxu0 0.0
    %217 = vmatpush1.xpose.msra.mxu0 %v187
    %218 = vmatprep.subr.mxu0 0.0
    %219 = vmatpush1.xpose.msra.mxu0 %v188
    %220 = vmatprep.subr.mxu0 0.0
    %221 = vmatpush1.xpose.msra.mxu0 %v189
    %222 = vmatprep.subr.mxu0 0.0
    %223 = vmatpush1.xpose.msra.mxu0 0.0
    %224 = vmatprep.subr.mxu0 0.0
    %225 = vmatpush1.xpose.msra.mxu0 0.0
    %226 = vmatprep.subr.mxu0 0.0
    %227 = vmatpush1.xpose.msra.mxu0 0.0
    %228 = vmatprep.subr.mxu0 0.0
    %229 = vmatpush1.xpose.msra.mxu0 0.0
    %230 = vmatprep.subr.mxu0 0.0
    %231 = vmatpush1.xpose.msra.mxu0 0.0
    %232 = vmatprep.subr.mxu0 0.0
    %233 = vmatpush1.xpose.msra.mxu0 0.0
    %234 = vmatprep.subr.mxu0 0.0
    %235 = vmatpush1.xpose.msra.mxu0 0.0
    %236 = vmatprep.subr.mxu0 0.0
    %237 = vmatpush1.xpose.msra.mxu0 0.0
    %238 = vmatprep.subr.mxu0 0.0
    %239 = vmatpush1.xpose.msra.mxu0 0.0
    %240 = vmatprep.subr.mxu0 0.0
    %241 = vmatpush1.xpose.msra.mxu0 0.0
    %242 = vmatprep.subr.mxu0 0.0
    %243 = vmatpush1.xpose.msra.mxu0 0.0
    %244 = vmatprep.subr.mxu0 0.0
    %245 = vmatpush1.xpose.msra.mxu0 0.0
    %246 = vmatprep.subr.mxu0 0.0
    %247 = vmatpush1.xpose.msra.mxu0 0.0
    %248 = vmatprep.subr.mxu0 0.0
    %249 = vmatpush1.xpose.msra.mxu0 0.0
    %250 = vmatprep.subr.mxu0 0.0
    %251 = vmatpush1.xpose.msra.mxu0 0.0
    %252 = vmatprep.subr.mxu0 0.0
    %253 = vmatpush1.xpose.msra.mxu0 0.0
    %254 = vmatprep.mubr.f32.mxu0 0.0
    %255 = vmatmul.mubr.f32.gmra.mrb[0].mxu0 %v171
    %v256 = vpop.f32.mrb[0].mxu0
    %v257 = vadd.f32 0.0, %v256
    %v258 = vpop.f32.mrb[0].mxu0
    %259 = vdwg.mxu0
    %v261 = vlaneseq
    %v262 = vshrl.u32 %v261, 7
    %v263 = vsub.s32 0, %v262
    %v264 = vrot.slane %v173, %v263
    %v266 = vmul.f32 %v264, %v257
    %v267 = vadd.f32 %v172, %v266
    %268 = vst [vmem:[#allocation2] sm:$0xff] %v267
    // Predicated region
    $region50: #{tpu_custom_call.1} parent=1 // pred_check
      %p269 = pneg %p69
    $region51: #{tpu_custom_call.1} parent=1 // pred_check_branch
      %271 = sbr.rel (%p269) target = $region53
    $region52: #{tpu_custom_call.1} parent=1 // pred_region
      %v272 = vld [vmem:[%s5] sm:$0x1]
      %v273 = vld [vmem:[%s6] sm:$0x1]
      %v274 = vld [vmem:[%s7] sm:$0x1]
      %v275 = vmul.f32 %v273, %v274
      %v276 = vadd.f32 %v272, %v275
      %v277 = vld [vmem:[#allocation2] sm:$0xff]
      %v279 = vlaneseq
      %v280 = vshrl.u32 %v279, 7
      %v281 = vsub.s32 0, %v280
      %v282 = vrot.slane %v276, %v281
      %v284 = vadd.f32 %v277, %v282
      %285 = vst [vmem:[#allocation9] sm:$0xff] %v284
    $region53: #{tpu_custom_call.1} parent=1 // pred_fallthru
      _
    // Predicated region
    $region54: #{tpu_custom_call.1} parent=1 // pred_check
      _
    $region55: #{tpu_custom_call.1} parent=1 // pred_check_branch
      %287 = sbr.rel (0) target = $region57
    $region56: #{tpu_custom_call.1} parent=1 // pred_region
      %s289 = ssub.s32 128, 128
      %290 = vsyncadd [#allocation5], %s289
      %s292 = sshll.u32 [#allocation9], 4
      %s293 = int_to_ptr.vmem [resolvable:$true] %s292
      %295 = dma.vmem_to_hbm [thread:$0]  %s293, 128, %s8, [#allocation5]
    $region57: #{tpu_custom_call.1} parent=1 // pred_fallthru
      _
    // Predicated region
    $region58: #{tpu_custom_call.1} parent=1 // pred_check
      _
    $region59: #{tpu_custom_call.1} parent=1 // pred_check_branch
      %297 = sbr.rel (0) target = $region61
    $region60: #{tpu_custom_call.1} parent=1 // pred_region
      %298 = dma.done [#allocation5], 128
    $region61: #{tpu_custom_call.1} parent=1 // pred_fallthru
      _
    %299 = vsyncpa [#allocation4], 1
    %300 = vsyncpa [#allocation7], 1
    %301 = vsyncpa [#allocation5], 1

</llo_original>
